<compile_context>
chip_gen: v7x
topology: tpu7x:2x2x1
jax: 0.10.0
libtpu: 0.0.40
codegen_flags: <defaults>
</compile_context>

<pallas_src>
import jax
import jax.numpy as jnp
from jax.experimental import pallas as pl
from jax.experimental.pallas import tpu as pltpu

IN_DIM = 50
HID_DIM = 256
OUT_DIM = 784

IN_PAD = 64      # 50 -> 64  (sublane multiple of 8; col 50 carries the bias 1s)
OUT_PAD = 896    # 784 -> 896 (lane multiple of 128; do NOT pad to 1024)


def _round_up(x, m):
    return ((x + m - 1) // m) * m


def _cdiv(a, b):
    return -(-a // b)


def _choose_tiling(B, max_tb):
    """Pick (TB, B_pad, n_tiles): TB multiple of 8, minimal batch padding,
    and >= 2 tiles when B allows it so both v7x TensorCores get work."""
    B8 = _round_up(max(B, 1), 8)
    n_tiles = max(_cdiv(B8, max_tb), 2 if B8 >= 16 else 1)
    TB = _round_up(_cdiv(B8, n_tiles), 8)
    n_tiles = _cdiv(B8, TB)
    B_pad = n_tiles * TB
    return TB, B_pad, n_tiles


def gene_kernel(x_ref, w1_ref, w2_ref, b2_ref, o_ref):
    # fc1 (+ bias folded into row IN_DIM of w1 / the 1.0 column of x) + relu.
    # bf16 MXU inputs, f32 accumulation.
    h = jnp.dot(x_ref[...], w1_ref[...], preferred_element_type=jnp.float32)
    h = jnp.maximum(h, 0.0)                              # (TB, 256) f32
    # fc2 + tanh (f32 epilogue, f32 store).
    y = jnp.dot(h.astype(jnp.bfloat16), w2_ref[...],
                preferred_element_type=jnp.float32)      # (TB, 896)
    o_ref[...] = jnp.tanh(y + b2_ref[...]).astype(o_ref.dtype)


def prepare_params(w1, b1, w2, b2):
    """One-time: pad to lane/sublane-aligned shapes, fold b1 into w1, cast to bf16."""
    b1 = jnp.reshape(b1, (-1,))
    b2 = jnp.reshape(b2, (1, -1))
    w1_aug = jnp.zeros((IN_PAD, HID_DIM), jnp.float32)
    w1_aug = w1_aug.at[:IN_DIM, :].set(w1)
    w1_aug = w1_aug.at[IN_DIM, :].set(b1)                 # bias row (pairs with x's 1s col)
    w2_p = jnp.pad(w2, ((0, 0), (0, OUT_PAD - OUT_DIM)))  # (256, 896)
    b2_p = jnp.pad(b2, ((0, 0), (0, OUT_PAD - OUT_DIM)))  # (1, 896), stays f32
    return (w1_aug.astype(jnp.bfloat16),
            w2_p.astype(jnp.bfloat16),
            b2_p.astype(jnp.float32))


def gene_forward(x, w1_p, w2_p, b2_p, *, max_tb=1024):
    """x: (B, 50) f32.  Weights must already be prepared via prepare_params."""
    B = x.shape[0]
    TB, B_pad, n_tiles = _choose_tiling(B, max_tb)

    # Pad batch (to a small multiple of 8-per-tile) and features (50 -> 64),
    # set the bias column to 1.0, feed the MXU bf16.
    x_p = jnp.zeros((B_pad, IN_PAD), jnp.float32)
    x_p = x_p.at[:B, :IN_DIM].set(x)
    x_p = x_p.at[:, IN_DIM].set(1.0)
    x_p = x_p.astype(jnp.bfloat16)

    out_p = pl.pallas_call(
        gene_kernel,
        out_shape=jax.ShapeDtypeStruct((B_pad, OUT_PAD), jnp.float32),
        grid=(n_tiles,),
        in_specs=[
            pl.BlockSpec((TB, IN_PAD), lambda i: (i, 0)),        # x tile (streams)
            pl.BlockSpec((IN_PAD, HID_DIM), lambda i: (0, 0)),   # w1+b1 (resident)
            pl.BlockSpec((HID_DIM, OUT_PAD), lambda i: (0, 0)),  # w2 (resident)
            pl.BlockSpec((1, OUT_PAD), lambda i: (0, 0)),        # b2 (resident)
        ],
        out_specs=pl.BlockSpec((TB, OUT_PAD), lambda i: (i, 0)),
        compiler_params=pltpu.CompilerParams(
            dimension_semantics=("parallel",)),                  # batch axis -> both v7x TCs
    )(x_p, w1_p, w2_p, b2_p)

    return out_p[:B, :OUT_DIM]


def init_params(key):
    # PyTorch nn.Linear default init: U(-1/sqrt(fan_in), +1/sqrt(fan_in)).
    k1, k2, k3, k4 = jax.random.split(key, 4)
    bound1 = 1.0 / jnp.sqrt(IN_DIM)
    bound2 = 1.0 / jnp.sqrt(HID_DIM)
    # PyTorch stores (out, in); we keep (in, out) so the kernel does x @ W.
    w1 = jax.random.uniform(k1, (IN_DIM, HID_DIM), jnp.float32, -bound1, bound1)
    b1 = jax.random.uniform(k2, (HID_DIM,), jnp.float32, -bound1, bound1)
    w2 = jax.random.uniform(k3, (HID_DIM, OUT_DIM), jnp.float32, -bound2, bound2)
    b2 = jax.random.uniform(k4, (OUT_DIM,), jnp.float32, -bound2, bound2)
    return w1, b1, w2, b2


if __name__ == "__main__":
    key = jax.random.PRNGKey(0)
    kx, kp = jax.random.split(key)
    w1, b1, w2, b2 = init_params(kp)
    w1_p, w2_p, b2_p = prepare_params(w1, b1, w2, b2)

    def ref_fn(x):
        return jnp.tanh(jnp.maximum(x @ w1 + b1, 0.0) @ w2 + b2)

    # Small batch (single grid step) and a batch that exercises grid > 1.
    for B in (8, 24):
        x = jax.random.normal(jax.random.fold_in(kx, B), (B, IN_DIM), jnp.float32)
        out = jax.block_until_ready(gene_forward(x, w1_p, w2_p, b2_p))
        ref = ref_fn(x)
        assert out.shape == (B, OUT_DIM)
        # Tolerance deliberately relaxed to 2e-2: the MXU runs on bf16 inputs
        # (f32 accumulation / epilogue), per the performance review.
        assert jnp.allclose(out, ref, atol=2e-2, rtol=2e-2), (
            f"B={B} max |err| = {jnp.max(jnp.abs(out - ref))}")

    print("KERNEL_OK")
</pallas_src>

<mosaic_0001>
module attributes {stable_mosaic.version = 11 : i64} {
  func.func @gene_kernel(%arg0: i32, %arg1: memref<8x64xbf16, #tpu.memory_space<vmem>>, %arg2: memref<64x256xbf16, #tpu.memory_space<vmem>>, %arg3: memref<256x896xbf16, #tpu.memory_space<vmem>>, %arg4: memref<1x896xf32, #tpu.memory_space<vmem>>, %arg5: memref<8x896xf32, #tpu.memory_space<vmem>>) attributes {dimension_semantics = [#tpu.dimension_semantics<parallel>], iteration_bounds = array<i64: 1>, scalar_prefetch = 0 : i64, scratch_operands = 0 : i64, tpu.core_type = #tpu.core_type<tc>, window_params = [{transform_indices = @transform_0, window_bounds = array<i64: 8, 64>}, {pipeline_mode = #tpu.pipeline_mode<synchronous>, transform_indices = @transform_1, window_bounds = array<i64: 64, 256>}, {pipeline_mode = #tpu.pipeline_mode<synchronous>, transform_indices = @transform_2, window_bounds = array<i64: 256, 896>}, {pipeline_mode = #tpu.pipeline_mode<synchronous>, transform_indices = @transform_3, window_bounds = array<i64: 1, 896>}, {transform_indices = @transform_4, window_bounds = array<i64: 8, 896>}]} {
    %c0 = arith.constant 0 : index
    %c0_0 = arith.constant 0 : index
    %0 = vector.load %arg1[%c0, %c0_0] : memref<8x64xbf16, #tpu.memory_space<vmem>>, vector<8x64xbf16>
    %c0_1 = arith.constant 0 : index
    %c0_2 = arith.constant 0 : index
    %1 = vector.load %arg2[%c0_1, %c0_2] : memref<64x256xbf16, #tpu.memory_space<vmem>>, vector<64x256xbf16>
    %cst = arith.constant dense<0.000000e+00> : vector<8x256xf32>
    %2 = tpu.matmul %0, %1, %cst {dimension_numbers = #tpu.dot_dimension_numbers<[1], [0], [0], [1], [0, 0, 1, 1], [], []>} : vector<8x64xbf16>, vector<64x256xbf16>, vector<8x256xf32> -> vector<8x256xf32>
    %cst_3 = arith.constant 0.000000e+00 : f32
    %3 = vector.broadcast %cst_3 : f32 to vector<8x256xf32>
    %4 = arith.maximumf %2, %3 : vector<8x256xf32>
    %5 = arith.truncf %4 : vector<8x256xf32> to vector<8x256xbf16>
    %c0_4 = arith.constant 0 : index
    %c0_5 = arith.constant 0 : index
    %6 = vector.load %arg3[%c0_4, %c0_5] : memref<256x896xbf16, #tpu.memory_space<vmem>>, vector<256x896xbf16>
    %cst_6 = arith.constant dense<0.000000e+00> : vector<8x896xf32>
    %7 = tpu.matmul %5, %6, %cst_6 {dimension_numbers = #tpu.dot_dimension_numbers<[1], [0], [0], [1], [0, 0, 1, 1], [], []>} : vector<8x256xbf16>, vector<256x896xbf16>, vector<8x896xf32> -> vector<8x896xf32>
    %c0_7 = arith.constant 0 : index
    %c0_8 = arith.constant 0 : index
    %8 = vector.load %arg4[%c0_7, %c0_8] : memref<1x896xf32, #tpu.memory_space<vmem>>, vector<1x896xf32>
    %9 = vector.broadcast %8 : vector<1x896xf32> to vector<8x896xf32>
    %10 = arith.addf %7, %9 : vector<8x896xf32>
    %11 = math.tanh %10 : vector<8x896xf32>
    %c0_9 = arith.constant 0 : index
    %c0_10 = arith.constant 0 : index
    %12 = vector.load %arg5[%c0_9, %c0_10] : memref<8x896xf32, #tpu.memory_space<vmem>>, vector<8x896xf32>
    tpu.vector_store %arg5[%c0_9, %c0_10], %11 {strides = array<i32>} : memref<8x896xf32, #tpu.memory_space<vmem>>, vector<8x896xf32>,
    return
  }
  func.func @transform_0(%arg0: i32) -> (i32, i32) {
    %c0_i32 = arith.constant 0 : i32
    %c0_i32_0 = arith.constant 0 : i32
    return %arg0, %c0_i32 : i32, i32
  }
  func.func @transform_1(%arg0: i32) -> (i32, i32) {
    %c0_i32 = arith.constant 0 : i32
    %c0_i32_0 = arith.constant 0 : i32
    %c0_i32_1 = arith.constant 0 : i32
    return %c0_i32, %c0_i32_0 : i32, i32
  }
  func.func @transform_2(%arg0: i32) -> (i32, i32) {
    %c0_i32 = arith.constant 0 : i32
    %c0_i32_0 = arith.constant 0 : i32
    %c0_i32_1 = arith.constant 0 : i32
    return %c0_i32, %c0_i32_0 : i32, i32
  }
  func.func @transform_3(%arg0: i32) -> (i32, i32) {
    %c0_i32 = arith.constant 0 : i32
    %c0_i32_0 = arith.constant 0 : i32
    %c0_i32_1 = arith.constant 0 : i32
    return %c0_i32, %c0_i32_0 : i32, i32
  }
  func.func @transform_4(%arg0: i32) -> (i32, i32) {
    %c0_i32 = arith.constant 0 : i32
    %c0_i32_0 = arith.constant 0 : i32
    return %arg0, %c0_i32 : i32, i32
  }
}

</mosaic_0001>

<llo_original>
// kernel: tpu_custom_call.1
$region0: #{tpu_custom_call.1}
  #allocation0 [shape = 'u32[]', space=smem, size = 0x4, offset = 0x4, fixed_abs, tag = 'smem constant byte address 0x4 - core index']
  #allocation1 [shape = 'u32[144,128]{1,0:T(1,128)}', space=vmem, size = 0x12000, scoped, tag = 'internal scratch']
  %s0 = inlined_call_operand.hbm [shape: bf16[8,64], index: 0, kind: input, shape index: {}]
  %s1 = inlined_call_operand.hbm [shape: bf16[64,256], index: 1, kind: input, shape index: {}]
  %s2 = inlined_call_operand.hbm [shape: bf16[256,896], index: 2, kind: input, shape index: {}]
  %s3 = inlined_call_operand.vmem [shape: f32[1,896], index: 3, kind: input, shape index: {}]
  %s4 = inlined_call_operand.hbm [shape: f32[8,896], index: 4, kind: output, shape index: {}]
  %s5 = sld [smem:[#allocation0]]
  $region38: #{tpu_custom_call.1} parent=0
    _
  %s7 = ssub.s32 1, %s5
  %s8 = scalar_select 0, %s7, %s5
  $region1: #{tpu_custom_call.1} parent=0
    #allocation2 [shape = 'u8[2048]{0}', space=vmem, size = 0x800, scoped, tag = 'input window, operand 0, single buffered']
    #allocation3 [shape = 's32[1]{0}', space=sflag, size = 0x4, scoped, tag = 'scoped memory for tpu_custom_call.1']
    #allocation4 [shape = 's32[1]{0}', space=sflag, size = 0x4, scoped, tag = 'scoped memory for tpu_custom_call.1']
    #allocation5 [shape = 'u8[32768]{0}', space=vmem, size = 0x8000, scoped, tag = 'input window, operand 1, single buffered']
    #allocation6 [shape = 's32[1]{0}', space=sflag, size = 0x4, scoped, tag = 'scoped memory for tpu_custom_call.1']
    #allocation7 [shape = 'u8[458752]{0}', space=vmem, size = 0x70000, scoped, tag = 'input window, operand 2, single buffered']
    #allocation8 [shape = 'u8[28672]{0}', space=vmem, size = 0x7000, scoped, tag = 'output window, operand 0, single buffered']
    %9 = vsyncpa [#allocation3], 0
    %10 = vsyncpa [#allocation6], 0
    %11 = vsyncpa [#allocation4], 0
    // Predicated region
    $region2: #{tpu_custom_call.1} parent=1 // pred_check
      _
    $region3: #{tpu_custom_call.1} parent=1 // pred_check_branch
      %13 = sbr.rel (0) target = $region5
    $region4: #{tpu_custom_call.1} parent=1 // pred_region
      %s15 = ssub.s32 64, 64
      %16 = vsyncadd [#allocation3], %s15
      %s18 = sshll.u32 [#allocation2], 4
      %s19 = int_to_ptr.vmem [resolvable:$true] %s18
      %21 = dma.hbm_to_vmem [thread:$0]  %s0, 64, %s19, [#allocation3]
    $region5: #{tpu_custom_call.1} parent=1 // pred_fallthru
      _
    // Predicated region
    $region6: #{tpu_custom_call.1} parent=1 // pred_check
      _
    $region7: #{tpu_custom_call.1} parent=1 // pred_check_branch
      %23 = sbr.rel (0) target = $region9
    $region8: #{tpu_custom_call.1} parent=1 // pred_region
      %s25 = ssub.s32 1024, 1024
      %26 = vsyncadd [#allocation6], %s25
      %s27 = sshll.u32 [#allocation5], 4
      %s28 = int_to_ptr.vmem [resolvable:$true] %s27
      %33 = dma.hbm_to_vmem [thread:$0]  %s1, 1024, %s28, [#allocation6], 128, 128, 8
    $region9: #{tpu_custom_call.1} parent=1 // pred_fallthru
      _
    // Predicated region
    $region10: #{tpu_custom_call.1} parent=1 // pred_check
      _
    $region11: #{tpu_custom_call.1} parent=1 // pred_check_branch
      %35 = sbr.rel (0) target = $region13
    $region12: #{tpu_custom_call.1} parent=1 // pred_region
      %s37 = ssub.s32 14336, 14336
      %38 = vsyncadd [#allocation6], %s37
      %s39 = sshll.u32 [#allocation7], 4
      %s40 = int_to_ptr.vmem [resolvable:$true] %s39
      %45 = dma.hbm_to_vmem [thread:$0]  %s2, 14336, %s40, [#allocation6], 448, 448, 28
    $region13: #{tpu_custom_call.1} parent=1 // pred_fallthru
      _
    // Predicated region
    $region14: #{tpu_custom_call.1} parent=1 // pred_check
      _
    $region15: #{tpu_custom_call.1} parent=1 // pred_check_branch
      %47 = sbr.rel (0) target = $region17
    $region16: #{tpu_custom_call.1} parent=1 // pred_region
      _
    $region17: #{tpu_custom_call.1} parent=1 // pred_fallthru
      _
    // Predicated region
    $region18: #{tpu_custom_call.1} parent=1 // pred_check
      _
    $region19: #{tpu_custom_call.1} parent=1 // pred_check_branch
      %49 = sbr.rel (0) target = $region21
    $region20: #{tpu_custom_call.1} parent=1 // pred_region
      %50 = dma.done [#allocation3], 64
    $region21: #{tpu_custom_call.1} parent=1 // pred_fallthru
      _
    // Predicated region
    $region22: #{tpu_custom_call.1} parent=1 // pred_check
      _
    $region23: #{tpu_custom_call.1} parent=1 // pred_check_branch
      %52 = sbr.rel (0) target = $region25
    $region24: #{tpu_custom_call.1} parent=1 // pred_region
      %53 = dma.done [#allocation6], 1024
    $region25: #{tpu_custom_call.1} parent=1 // pred_fallthru
      _
    // Predicated region
    $region26: #{tpu_custom_call.1} parent=1 // pred_check
      _
    $region27: #{tpu_custom_call.1} parent=1 // pred_check_branch
      %55 = sbr.rel (0) target = $region29
    $region28: #{tpu_custom_call.1} parent=1 // pred_region
      %56 = dma.done [#allocation6], 14336
    $region29: #{tpu_custom_call.1} parent=1 // pred_fallthru
      _
    %v58 = vld [vmem:[#allocation2] sm:$0xf]
    %v59 = vld [vmem:[#allocation5] sm:$0xff]
    %v60 = vld [vmem:[#allocation5 + $0x8] sm:$0xff]
    %v61 = vld [vmem:[#allocation5 + $0x10] sm:$0xff]
    %v62 = vld [vmem:[#allocation5 + $0x18] sm:$0xff]
    %v63 = vld [vmem:[#allocation5 + $0x20] sm:$0xff]
    %v64 = vld [vmem:[#allocation5 + $0x28] sm:$0xff]
    %v65 = vld [vmem:[#allocation5 + $0x30] sm:$0xff]
    %v66 = vld [vmem:[#allocation5 + $0x38] sm:$0xff]
    %v75 = vunpack.c.l.b16 %v59
    %v76 = vunpack.c.h.b16 %v59
    %v77 = vunpack.c.l.b16 %v60
    %v78 = vunpack.c.h.b16 %v60
    %v79 = vunpack.c.l.b16 %v61
    %v80 = vunpack.c.h.b16 %v61
    %v81 = vunpack.c.l.b16 %v62
    %v82 = vunpack.c.h.b16 %v62
    %v83 = vunpack.c.l.b16 %v63
    %v84 = vunpack.c.h.b16 %v63
    %v85 = vunpack.c.l.b16 %v64
    %v86 = vunpack.c.h.b16 %v64
    %v87 = vunpack.c.l.b16 %v65
    %v88 = vunpack.c.h.b16 %v65
    %v89 = vunpack.c.l.b16 %v66
    %v90 = vunpack.c.h.b16 %v66
    %v91 = vpack.c.b16 %v77, %v75
    %v92 = vpack.c.b16 %v78, %v76
    %v93 = vpack.c.b16 %v81, %v79
    %v94 = vpack.c.b16 %v82, %v80
    %v95 = vpack.c.b16 %v85, %v83
    %v96 = vpack.c.b16 %v86, %v84
    %v97 = vpack.c.b16 %v89, %v87
    %v98 = vpack.c.b16 %v90, %v88
    %vm107 = vcmask 523264
    %v109 = vsel %vm107, %v58, 0
    %111 = vmatprep.subr.bf16.mxu0 %v92
    %112 = vmatpush1.bf16.msra.mxu0 %v91
    %113 = vmatprep.subr.bf16.mxu0 %v94
    %114 = vmatpush1.bf16.msra.mxu0 %v93
    %115 = vmatprep.subr.bf16.mxu0 %v96
    %116 = vmatpush1.bf16.msra.mxu0 %v95
    %117 = vmatprep.subr.bf16.mxu0 %v98
    %118 = vmatpush1.bf16.msra.mxu0 %v97
    %119 = vmatprep.subr.bf16.mxu0 0
    %120 = vmatpush1.bf16.msra.mxu0 0
    %121 = vmatprep.subr.bf16.mxu0 0
    %122 = vmatpush1.bf16.msra.mxu0 0
    %123 = vmatprep.subr.bf16.mxu0 0
    %124 = vmatpush1.bf16.msra.mxu0 0
    %125 = vmatprep.subr.bf16.mxu0 0
    %126 = vmatpush1.bf16.msra.mxu0 0
    %127 = vmatprep.subr.bf16.mxu0 0
    %128 = vmatpush1.bf16.msra.mxu0 0
    %129 = vmatprep.subr.bf16.mxu0 0
    %130 = vmatpush1.bf16.msra.mxu0 0
    %131 = vmatprep.subr.bf16.mxu0 0
    %132 = vmatpush1.bf16.msra.mxu0 0
    %133 = vmatprep.subr.bf16.mxu0 0
    %134 = vmatpush1.bf16.msra.mxu0 0
    %135 = vmatprep.subr.bf16.mxu0 0
    %136 = vmatpush1.bf16.msra.mxu0 0
    %137 = vmatprep.subr.bf16.mxu0 0
    %138 = vmatpush1.bf16.msra.mxu0 0
    %139 = vmatprep.subr.bf16.mxu0 0
    %140 = vmatpush1.bf16.msra.mxu0 0
    %141 = vmatprep.subr.bf16.mxu0 0
    %142 = vmatpush1.bf16.msra.mxu0 0
    %143 = vmatprep.mubr.bf16.mxu0 0
    %144 = vmatmul.mubr.bf16.gmra.mrb[0].mxu0 %v109
    %v145 = vpop.f32.mrb[0].mxu0
    %v146 = vadd.f32 0.0, %v145
    %v147 = vpop.f32.mrb[0].mxu0
    %v148 = vadd.f32 0.0, %v147
    %v149 = vpop.f32.mrb[0].mxu0
    %v150 = vpop.f32.mrb[0].mxu0
    %151 = vdwg.mxu0
    %v152 = vmax.f32 %v146, 0.0
    %v153 = vmax.f32 %v148, 0.0
    %v154 = vpack.c.bf16 %v152, %v152
    %v155 = vpack.c.bf16 %v153, %v153
    %v156 = vld [vmem:[#allocation7] sm:$0xff]
    %v157 = vld [vmem:[#allocation7 + $0x8] sm:$0xff]
    %v158 = vld [vmem:[#allocation7 + $0x10] sm:$0xff]
    %v159 = vld [vmem:[#allocation7 + $0x18] sm:$0xf]
    %v160 = vld [vmem:[#allocation7 + $0x1c] sm:$0xff]
    %v161 = vld [vmem:[#allocation7 + $0x24] sm:$0xff]
    %v162 = vld [vmem:[#allocation7 + $0x2c] sm:$0xff]
    %v163 = vld [vmem:[#allocation7 + $0x34] sm:$0xf]
    %v164 = vld [vmem:[#allocation7 + $0x38] sm:$0xff]
    %v165 = vld [vmem:[#allocation7 + $0x40] sm:$0xff]
    %v166 = vld [vmem:[#allocation7 + $0x48] sm:$0xff]
    %v167 = vld [vmem:[#allocation7 + $0x50] sm:$0xf]
    %v168 = vld [vmem:[#allocation7 + $0x54] sm:$0xff]
    %v169 = vld [vmem:[#allocation7 + $0x5c] sm:$0xff]
    %v170 = vld [vmem:[#allocation7 + $0x64] sm:$0xff]
    %v171 = vld [vmem:[#allocation7 + $0x6c] sm:$0xf]
    %v172 = vld [vmem:[#allocation7 + $0x70] sm:$0xff]
    %v173 = vld [vmem:[#allocation7 + $0x78] sm:$0xff]
    %v174 = vld [vmem:[#allocation7 + $0x80] sm:$0xff]
    %v175 = vld [vmem:[#allocation7 + $0x88] sm:$0xf]
    %v176 = vld [vmem:[#allocation7 + $0x8c] sm:$0xff]
    %v177 = vld [vmem:[#allocation7 + $0x94] sm:$0xff]
    %v178 = vld [vmem:[#allocation7 + $0x9c] sm:$0xff]
    %v179 = vld [vmem:[#allocation7 + $0xa4] sm:$0xf]
    %v180 = vld [vmem:[#allocation7 + $0xa8] sm:$0xff]
    %v181 = vld [vmem:[#allocation7 + $0xb0] sm:$0xff]
    %v182 = vld [vmem:[#allocation7 + $0xb8] sm:$0xff]
    %v183 = vld [vmem:[#allocation7 + $0xc0] sm:$0xf]
    %v184 = vld [vmem:[#allocation7 + $0xc4] sm:$0xff]
    %v185 = vld [vmem:[#allocation7 + $0xcc] sm:$0xff]
    %v186 = vld [vmem:[#allocation7 + $0xd4] sm:$0xff]
    %v187 = vld [vmem:[#allocation7 + $0xdc] sm:$0xf]
    %v188 = vld [vmem:[#allocation7 + $0xe0] sm:$0xff]
    %v189 = vld [vmem:[#allocation7 + $0xe8] sm:$0xff]
    %v190 = vld [vmem:[#allocation7 + $0xf0] sm:$0xff]
    %v191 = vld [vmem:[#allocation7 + $0xf8] sm:$0xf]
    %v192 = vld [vmem:[#allocation7 + $0xfc] sm:$0xff]
    %v193 = vld [vmem:[#allocation7 + $0x104] sm:$0xff]
    %v194 = vld [vmem:[#allocation7 + $0x10c] sm:$0xff]
    %v195 = vld [vmem:[#allocation7 + $0x114] sm:$0xf]
    %v196 = vld [vmem:[#allocation7 + $0x118] sm:$0xff]
    %v197 = vld [vmem:[#allocation7 + $0x120] sm:$0xff]
    %v198 = vld [vmem:[#allocation7 + $0x128] sm:$0xff]
    %v199 = vld [vmem:[#allocation7 + $0x130] sm:$0xf]
    %v200 = vld [vmem:[#allocation7 + $0x134] sm:$0xff]
    %v201 = vld [vmem:[#allocation7 + $0x13c] sm:$0xff]
    %v202 = vld [vmem:[#allocation7 + $0x144] sm:$0xff]
    %v203 = vld [vmem:[#allocation7 + $0x14c] sm:$0xf]
    %v204 = vld [vmem:[#allocation7 + $0x150] sm:$0xff]
    %v205 = vld [vmem:[#allocation7 + $0x158] sm:$0xff]
    %v206 = vld [vmem:[#allocation7 + $0x160] sm:$0xff]
    %v207 = vld [vmem:[#allocation7 + $0x168] sm:$0xf]
    %v208 = vld [vmem:[#allocation7 + $0x16c] sm:$0xff]
    %v209 = vld [vmem:[#allocation7 + $0x174] sm:$0xff]
    %v210 = vld [vmem:[#allocation7 + $0x17c] sm:$0xff]
    %v211 = vld [vmem:[#allocation7 + $0x184] sm:$0xf]
    %v212 = vld [vmem:[#allocation7 + $0x188] sm:$0xff]
    %v213 = vld [vmem:[#allocation7 + $0x190] sm:$0xff]
    %v214 = vld [vmem:[#allocation7 + $0x198] sm:$0xff]
    %v215 = vld [vmem:[#allocation7 + $0x1a0] sm:$0xf]
    %v216 = vld [vmem:[#allocation7 + $0x1a4] sm:$0xff]
    %v217 = vld [vmem:[#allocation7 + $0x1ac] sm:$0xff]
    %v218 = vld [vmem:[#allocation7 + $0x1b4] sm:$0xff]
    %v219 = vld [vmem:[#allocation7 + $0x1bc] sm:$0xf]
    %v220 = vld [vmem:[#allocation7 + $0x1c0] sm:$0xff]
    %v221 = vld [vmem:[#allocation7 + $0x1c8] sm:$0xff]
    %v222 = vld [vmem:[#allocation7 + $0x1d0] sm:$0xff]
    %v223 = vld [vmem:[#allocation7 + $0x1d8] sm:$0xf]
    %v224 = vld [vmem:[#allocation7 + $0x1dc] sm:$0xff]
    %v225 = vld [vmem:[#allocation7 + $0x1e4] sm:$0xff]
    %v226 = vld [vmem:[#allocation7 + $0x1ec] sm:$0xff]
    %v227 = vld [vmem:[#allocation7 + $0x1f4] sm:$0xf]
    %v228 = vld [vmem:[#allocation7 + $0x1f8] sm:$0xff]
    %v229 = vld [vmem:[#allocation7 + $0x200] sm:$0xff]
    %v230 = vld [vmem:[#allocation7 + $0x208] sm:$0xff]
    %v231 = vld [vmem:[#allocation7 + $0x210] sm:$0xf]
    %v232 = vld [vmem:[#allocation7 + $0x214] sm:$0xff]
    %v233 = vld [vmem:[#allocation7 + $0x21c] sm:$0xff]
    %v234 = vld [vmem:[#allocation7 + $0x224] sm:$0xff]
    %v235 = vld [vmem:[#allocation7 + $0x22c] sm:$0xf]
    %v236 = vld [vmem:[#allocation7 + $0x230] sm:$0xff]
    %v237 = vld [vmem:[#allocation7 + $0x238] sm:$0xff]
    %v238 = vld [vmem:[#allocation7 + $0x240] sm:$0xff]
    %v239 = vld [vmem:[#allocation7 + $0x248] sm:$0xf]
    %v240 = vld [vmem:[#allocation7 + $0x24c] sm:$0xff]
    %v241 = vld [vmem:[#allocation7 + $0x254] sm:$0xff]
    %v242 = vld [vmem:[#allocation7 + $0x25c] sm:$0xff]
    %v243 = vld [vmem:[#allocation7 + $0x264] sm:$0xf]
    %v244 = vld [vmem:[#allocation7 + $0x268] sm:$0xff]
    %v245 = vld [vmem:[#allocation7 + $0x270] sm:$0xff]
    %v246 = vld [vmem:[#allocation7 + $0x278] sm:$0xff]
    %v247 = vld [vmem:[#allocation7 + $0x280] sm:$0xf]
    %v248 = vld [vmem:[#allocation7 + $0x284] sm:$0xff]
    %v249 = vld [vmem:[#allocation7 + $0x28c] sm:$0xff]
    %v250 = vld [vmem:[#allocation7 + $0x294] sm:$0xff]
    %v251 = vld [vmem:[#allocation7 + $0x29c] sm:$0xf]
    %v252 = vld [vmem:[#allocation7 + $0x2a0] sm:$0xff]
    %v253 = vld [vmem:[#allocation7 + $0x2a8] sm:$0xff]
    %v254 = vld [vmem:[#allocation7 + $0x2b0] sm:$0xff]
    %v255 = vld [vmem:[#allocation7 + $0x2b8] sm:$0xf]
    %v256 = vld [vmem:[#allocation7 + $0x2bc] sm:$0xff]
    %v257 = vld [vmem:[#allocation7 + $0x2c4] sm:$0xff]
    %v258 = vld [vmem:[#allocation7 + $0x2cc] sm:$0xff]
    %v259 = vld [vmem:[#allocation7 + $0x2d4] sm:$0xf]
    %v260 = vld [vmem:[#allocation7 + $0x2d8] sm:$0xff]
    %v261 = vld [vmem:[#allocation7 + $0x2e0] sm:$0xff]
    %v262 = vld [vmem:[#allocation7 + $0x2e8] sm:$0xff]
    %v263 = vld [vmem:[#allocation7 + $0x2f0] sm:$0xf]
    %v264 = vld [vmem:[#allocation7 + $0x2f4] sm:$0xff]
    %v265 = vld [vmem:[#allocation7 + $0x2fc] sm:$0xff]
    %v266 = vld [vmem:[#allocation7 + $0x304] sm:$0xff]
    %v267 = vld [vmem:[#allocation7 + $0x30c] sm:$0xf]
    %v268 = vld [vmem:[#allocation7 + $0x310] sm:$0xff]
    %v269 = vld [vmem:[#allocation7 + $0x318] sm:$0xff]
    %v270 = vld [vmem:[#allocation7 + $0x320] sm:$0xff]
    %v271 = vld [vmem:[#allocation7 + $0x328] sm:$0xf]
    %v272 = vld [vmem:[#allocation7 + $0x32c] sm:$0xff]
    %v273 = vld [vmem:[#allocation7 + $0x334] sm:$0xff]
    %v274 = vld [vmem:[#allocation7 + $0x33c] sm:$0xff]
    %v275 = vld [vmem:[#allocation7 + $0x344] sm:$0xf]
    %v276 = vld [vmem:[#allocation7 + $0x348] sm:$0xff]
    %v277 = vld [vmem:[#allocation7 + $0x350] sm:$0xff]
    %v278 = vld [vmem:[#allocation7 + $0x358] sm:$0xff]
    %v279 = vld [vmem:[#allocation7 + $0x360] sm:$0xf]
    %v280 = vld [vmem:[#allocation7 + $0x364] sm:$0xff]
    %v281 = vld [vmem:[#allocation7 + $0x36c] sm:$0xff]
    %v282 = vld [vmem:[#allocation7 + $0x374] sm:$0xff]
    %v283 = vld [vmem:[#allocation7 + $0x37c] sm:$0xf]
    %v284 = vld [vmem:[%s3] sm:$0xff]
    %v286 = vlaneseq
    %v287 = vshrl.u32 %v286, 7
    %v288 = vsub.s32 0, %v287
    %v289 = vrot.slane %v284, %v288
    %v290 = vlaneseq
    %v291 = vshrl.u32 %v290, 7
    %v292 = vsub.s32 1, %v291
    %v293 = vrot.slane %v284, %v292
    %v294 = vlaneseq
    %v295 = vshrl.u32 %v294, 7
    %v296 = vsub.s32 2, %v295
    %v297 = vrot.slane %v284, %v296
    %v298 = vlaneseq
    %v299 = vshrl.u32 %v298, 7
    %v300 = vsub.s32 3, %v299
    %v301 = vrot.slane %v284, %v300
    %v302 = vlaneseq
    %v303 = vshrl.u32 %v302, 7
    %v304 = vsub.s32 4, %v303
    %v305 = vrot.slane %v284, %v304
    %v306 = vlaneseq
    %v307 = vshrl.u32 %v306, 7
    %v308 = vsub.s32 5, %v307
    %v309 = vrot.slane %v284, %v308
    %v310 = vlaneseq
    %v311 = vshrl.u32 %v310, 7
    %v312 = vsub.s32 6, %v311
    %v313 = vrot.slane %v284, %v312
    %v449 = vunpack.c.l.b16 %v156
    %v450 = vunpack.c.h.b16 %v156
    %v451 = vunpack.c.l.b16 %v157
    %v452 = vunpack.c.h.b16 %v157
    %v453 = vunpack.c.l.b16 %v158
    %v454 = vunpack.c.h.b16 %v158
    %v455 = vunpack.c.l.b16 %v159
    %v456 = vunpack.c.l.b16 %v160
    %v457 = vunpack.c.h.b16 %v160
    %v458 = vunpack.c.l.b16 %v161
    %v459 = vunpack.c.h.b16 %v161
    %v460 = vunpack.c.l.b16 %v162
    %v461 = vunpack.c.h.b16 %v162
    %v462 = vunpack.c.l.b16 %v163
    %v463 = vunpack.c.l.b16 %v164
    %v464 = vunpack.c.h.b16 %v164
    %v465 = vunpack.c.l.b16 %v165
    %v466 = vunpack.c.h.b16 %v165
    %v467 = vunpack.c.l.b16 %v166
    %v468 = vunpack.c.h.b16 %v166
    %v469 = vunpack.c.l.b16 %v167
    %v470 = vunpack.c.l.b16 %v168
    %v471 = vunpack.c.h.b16 %v168
    %v472 = vunpack.c.l.b16 %v169
    %v473 = vunpack.c.h.b16 %v169
    %v474 = vunpack.c.l.b16 %v170
    %v475 = vunpack.c.h.b16 %v170
    %v476 = vunpack.c.l.b16 %v171
    %v477 = vunpack.c.l.b16 %v172
    %v478 = vunpack.c.h.b16 %v172
    %v479 = vunpack.c.l.b16 %v173
    %v480 = vunpack.c.h.b16 %v173
    %v481 = vunpack.c.l.b16 %v174
    %v482 = vunpack.c.h.b16 %v174
    %v483 = vunpack.c.l.b16 %v175
    %v484 = vunpack.c.l.b16 %v176
    %v485 = vunpack.c.h.b16 %v176
    %v486 = vunpack.c.l.b16 %v177
    %v487 = vunpack.c.h.b16 %v177
    %v488 = vunpack.c.l.b16 %v178
    %v489 = vunpack.c.h.b16 %v178
    %v490 = vunpack.c.l.b16 %v179
    %v491 = vunpack.c.l.b16 %v180
    %v492 = vunpack.c.h.b16 %v180
    %v493 = vunpack.c.l.b16 %v181
    %v494 = vunpack.c.h.b16 %v181
    %v495 = vunpack.c.l.b16 %v182
    %v496 = vunpack.c.h.b16 %v182
    %v497 = vunpack.c.l.b16 %v183
    %v498 = vunpack.c.l.b16 %v184
    %v499 = vunpack.c.h.b16 %v184
    %v500 = vunpack.c.l.b16 %v185
    %v501 = vunpack.c.h.b16 %v185
    %v502 = vunpack.c.l.b16 %v186
    %v503 = vunpack.c.h.b16 %v186
    %v504 = vunpack.c.l.b16 %v187
    %v505 = vunpack.c.l.b16 %v188
    %v506 = vunpack.c.h.b16 %v188
    %v507 = vunpack.c.l.b16 %v189
    %v508 = vunpack.c.h.b16 %v189
    %v509 = vunpack.c.l.b16 %v190
    %v510 = vunpack.c.h.b16 %v190
    %v511 = vunpack.c.l.b16 %v191
    %v512 = vunpack.c.l.b16 %v192
    %v513 = vunpack.c.h.b16 %v192
    %v514 = vunpack.c.l.b16 %v193
    %v515 = vunpack.c.h.b16 %v193
    %v516 = vunpack.c.l.b16 %v194
    %v517 = vunpack.c.h.b16 %v194
    %v518 = vunpack.c.l.b16 %v195
    %v519 = vunpack.c.l.b16 %v196
    %v520 = vunpack.c.h.b16 %v196
    %v521 = vunpack.c.l.b16 %v197
    %v522 = vunpack.c.h.b16 %v197
    %v523 = vunpack.c.l.b16 %v198
    %v524 = vunpack.c.h.b16 %v198
    %v525 = vunpack.c.l.b16 %v199
    %v526 = vunpack.c.l.b16 %v200
    %v527 = vunpack.c.h.b16 %v200
    %v528 = vunpack.c.l.b16 %v201
    %v529 = vunpack.c.h.b16 %v201
    %v530 = vunpack.c.l.b16 %v202
    %v531 = vunpack.c.h.b16 %v202
    %v532 = vunpack.c.l.b16 %v203
    %v533 = vunpack.c.l.b16 %v204
    %v534 = vunpack.c.h.b16 %v204
    %v535 = vunpack.c.l.b16 %v205
    %v536 = vunpack.c.h.b16 %v205
    %v537 = vunpack.c.l.b16 %v206
    %v538 = vunpack.c.h.b16 %v206
    %v539 = vunpack.c.l.b16 %v207
    %v540 = vunpack.c.l.b16 %v208
    %v541 = vunpack.c.h.b16 %v208
    %v542 = vunpack.c.l.b16 %v209
    %v543 = vunpack.c.h.b16 %v209
    %v544 = vunpack.c.l.b16 %v210
    %v545 = vunpack.c.h.b16 %v210
    %v546 = vunpack.c.l.b16 %v211
    %v547 = vunpack.c.l.b16 %v212
    %v548 = vunpack.c.h.b16 %v212
    %v549 = vunpack.c.l.b16 %v213
    %v550 = vunpack.c.h.b16 %v213
    %v551 = vunpack.c.l.b16 %v214
    %v552 = vunpack.c.h.b16 %v214
    %v553 = vunpack.c.l.b16 %v215
    %v554 = vunpack.c.l.b16 %v216
    %v555 = vunpack.c.h.b16 %v216
    %v556 = vunpack.c.l.b16 %v217
    %v557 = vunpack.c.h.b16 %v217
    %v558 = vunpack.c.l.b16 %v218
    %v559 = vunpack.c.h.b16 %v218
    %v560 = vunpack.c.l.b16 %v219
    %v561 = vunpack.c.l.b16 %v220
    %v562 = vunpack.c.h.b16 %v220
    %v563 = vunpack.c.l.b16 %v221
    %v564 = vunpack.c.h.b16 %v221
    %v565 = vunpack.c.l.b16 %v222
    %v566 = vunpack.c.h.b16 %v222
    %v567 = vunpack.c.l.b16 %v223
    %v568 = vunpack.c.l.b16 %v224
    %v569 = vunpack.c.h.b16 %v224
    %v570 = vunpack.c.l.b16 %v225
    %v571 = vunpack.c.h.b16 %v225
    %v572 = vunpack.c.l.b16 %v226
    %v573 = vunpack.c.h.b16 %v226
    %v574 = vunpack.c.l.b16 %v227
    %v575 = vunpack.c.l.b16 %v228
    %v576 = vunpack.c.h.b16 %v228
    %v577 = vunpack.c.l.b16 %v229
    %v578 = vunpack.c.h.b16 %v229
    %v579 = vunpack.c.l.b16 %v230
    %v580 = vunpack.c.h.b16 %v230
    %v581 = vunpack.c.l.b16 %v231
    %v582 = vunpack.c.l.b16 %v232
    %v583 = vunpack.c.h.b16 %v232
    %v584 = vunpack.c.l.b16 %v233
    %v585 = vunpack.c.h.b16 %v233
    %v586 = vunpack.c.l.b16 %v234
    %v587 = vunpack.c.h.b16 %v234
    %v588 = vunpack.c.l.b16 %v235
    %v589 = vunpack.c.l.b16 %v236
    %v590 = vunpack.c.h.b16 %v236
    %v591 = vunpack.c.l.b16 %v237
    %v592 = vunpack.c.h.b16 %v237
    %v593 = vunpack.c.l.b16 %v238
    %v594 = vunpack.c.h.b16 %v238
    %v595 = vunpack.c.l.b16 %v239
    %v596 = vunpack.c.l.b16 %v240
    %v597 = vunpack.c.h.b16 %v240
    %v598 = vunpack.c.l.b16 %v241
    %v599 = vunpack.c.h.b16 %v241
    %v600 = vunpack.c.l.b16 %v242
    %v601 = vunpack.c.h.b16 %v242
    %v602 = vunpack.c.l.b16 %v243
    %v603 = vunpack.c.l.b16 %v244
    %v604 = vunpack.c.h.b16 %v244
    %v605 = vunpack.c.l.b16 %v245
    %v606 = vunpack.c.h.b16 %v245
    %v607 = vunpack.c.l.b16 %v246
    %v608 = vunpack.c.h.b16 %v246
    %v609 = vunpack.c.l.b16 %v247
    %v610 = vunpack.c.l.b16 %v248
    %v611 = vunpack.c.h.b16 %v248
    %v612 = vunpack.c.l.b16 %v249
    %v613 = vunpack.c.h.b16 %v249
    %v614 = vunpack.c.l.b16 %v250
    %v615 = vunpack.c.h.b16 %v250
    %v616 = vunpack.c.l.b16 %v251
    %v617 = vunpack.c.l.b16 %v252
    %v618 = vunpack.c.h.b16 %v252
    %v619 = vunpack.c.l.b16 %v253
    %v620 = vunpack.c.h.b16 %v253
    %v621 = vunpack.c.l.b16 %v254
    %v622 = vunpack.c.h.b16 %v254
    %v623 = vunpack.c.l.b16 %v255
    %v624 = vunpack.c.l.b16 %v256
    %v625 = vunpack.c.h.b16 %v256
    %v626 = vunpack.c.l.b16 %v257
    %v627 = vunpack.c.h.b16 %v257
    %v628 = vunpack.c.l.b16 %v258
    %v629 = vunpack.c.h.b16 %v258
    %v630 = vunpack.c.l.b16 %v259
    %v631 = vunpack.c.l.b16 %v260
    %v632 = vunpack.c.h.b16 %v260
    %v633 = vunpack.c.l.b16 %v261
    %v634 = vunpack.c.h.b16 %v261
    %v635 = vunpack.c.l.b16 %v262
    %v636 = vunpack.c.h.b16 %v262
    %v637 = vunpack.c.l.b16 %v263
    %v638 = vunpack.c.l.b16 %v264
    %v639 = vunpack.c.h.b16 %v264
    %v640 = vunpack.c.l.b16 %v265
    %v641 = vunpack.c.h.b16 %v265
    %v642 = vunpack.c.l.b16 %v266
    %v643 = vunpack.c.h.b16 %v266
    %v644 = vunpack.c.l.b16 %v267
    %v645 = vunpack.c.l.b16 %v268
    %v646 = vunpack.c.h.b16 %v268
    %v647 = vunpack.c.l.b16 %v269
    %v648 = vunpack.c.h.b16 %v269
    %v649 = vunpack.c.l.b16 %v270
    %v650 = vunpack.c.h.b16 %v270
    %v651 = vunpack.c.l.b16 %v271
    %v652 = vunpack.c.l.b16 %v272
    %v653 = vunpack.c.h.b16 %v272
    %v654 = vunpack.c.l.b16 %v273
    %v655 = vunpack.c.h.b16 %v273
    %v656 = vunpack.c.l.b16 %v274
    %v657 = vunpack.c.h.b16 %v274
    %v658 = vunpack.c.l.b16 %v275
    %v659 = vunpack.c.l.b16 %v276
    %v660 = vunpack.c.h.b16 %v276
    %v661 = vunpack.c.l.b16 %v277
    %v662 = vunpack.c.h.b16 %v277
    %v663 = vunpack.c.l.b16 %v278
    %v664 = vunpack.c.h.b16 %v278
    %v665 = vunpack.c.l.b16 %v279
    %v666 = vunpack.c.l.b16 %v280
    %v667 = vunpack.c.h.b16 %v280
    %v668 = vunpack.c.l.b16 %v281
    %v669 = vunpack.c.h.b16 %v281
    %v670 = vunpack.c.l.b16 %v282
    %v671 = vunpack.c.h.b16 %v282
    %v672 = vunpack.c.l.b16 %v283
    %v673 = vpack.c.b16 %v456, %v449
    %v674 = vpack.c.b16 %v457, %v450
    %v675 = vpack.c.b16 %v458, %v451
    %v676 = vpack.c.b16 %v459, %v452
    %v677 = vpack.c.b16 %v460, %v453
    %v678 = vpack.c.b16 %v461, %v454
    %v679 = vpack.c.b16 %v462, %v455
    %v680 = vpack.c.b16 %v470, %v463
    %v681 = vpack.c.b16 %v471, %v464
    %v682 = vpack.c.b16 %v472, %v465
    %v683 = vpack.c.b16 %v473, %v466
    %v684 = vpack.c.b16 %v474, %v467
    %v685 = vpack.c.b16 %v475, %v468
    %v686 = vpack.c.b16 %v476, %v469
    %v687 = vpack.c.b16 %v484, %v477
    %v688 = vpack.c.b16 %v485, %v478
    %v689 = vpack.c.b16 %v486, %v479
    %v690 = vpack.c.b16 %v487, %v480
    %v691 = vpack.c.b16 %v488, %v481
    %v692 = vpack.c.b16 %v489, %v482
    %v693 = vpack.c.b16 %v490, %v483
    %v694 = vpack.c.b16 %v498, %v491
    %v695 = vpack.c.b16 %v499, %v492
    %v696 = vpack.c.b16 %v500, %v493
    %v697 = vpack.c.b16 %v501, %v494
    %v698 = vpack.c.b16 %v502, %v495
    %v699 = vpack.c.b16 %v503, %v496
    %v700 = vpack.c.b16 %v504, %v497
    %v701 = vpack.c.b16 %v512, %v505
    %v702 = vpack.c.b16 %v513, %v506
    %v703 = vpack.c.b16 %v514, %v507
    %v704 = vpack.c.b16 %v515, %v508
    %v705 = vpack.c.b16 %v516, %v509
    %v706 = vpack.c.b16 %v517, %v510
    %v707 = vpack.c.b16 %v518, %v511
    %v708 = vpack.c.b16 %v526, %v519
    %v709 = vpack.c.b16 %v527, %v520
    %v710 = vpack.c.b16 %v528, %v521
    %v711 = vpack.c.b16 %v529, %v522
    %v712 = vpack.c.b16 %v530, %v523
    %v713 = vpack.c.b16 %v531, %v524
    %v714 = vpack.c.b16 %v532, %v525
    %v715 = vpack.c.b16 %v540, %v533
    %v716 = vpack.c.b16 %v541, %v534
    %v717 = vpack.c.b16 %v542, %v535
    %v718 = vpack.c.b16 %v543, %v536
    %v719 = vpack.c.b16 %v544, %v537
    %v720 = vpack.c.b16 %v545, %v538
    %v721 = vpack.c.b16 %v546, %v539
    %v722 = vpack.c.b16 %v554, %v547
    %v723 = vpack.c.b16 %v555, %v548
    %v724 = vpack.c.b16 %v556, %v549
    %v725 = vpack.c.b16 %v557, %v550
    %v726 = vpack.c.b16 %v558, %v551
    %v727 = vpack.c.b16 %v559, %v552
    %v728 = vpack.c.b16 %v560, %v553
    %v729 = vpack.c.b16 %v568, %v561
    %v730 = vpack.c.b16 %v569, %v562
    %v731 = vpack.c.b16 %v570, %v563
    %v732 = vpack.c.b16 %v571, %v564
    %v733 = vpack.c.b16 %v572, %v565
    %v734 = vpack.c.b16 %v573, %v566
    %v735 = vpack.c.b16 %v574, %v567
    %v736 = vpack.c.b16 %v582, %v575
    %v737 = vpack.c.b16 %v583, %v576
    %v738 = vpack.c.b16 %v584, %v577
    %v739 = vpack.c.b16 %v585, %v578
    %v740 = vpack.c.b16 %v586, %v579
    %v741 = vpack.c.b16 %v587, %v580
    %v742 = vpack.c.b16 %v588, %v581
    %v743 = vpack.c.b16 %v596, %v589
    %v744 = vpack.c.b16 %v597, %v590
    %v745 = vpack.c.b16 %v598, %v591
    %v746 = vpack.c.b16 %v599, %v592
    %v747 = vpack.c.b16 %v600, %v593
    %v748 = vpack.c.b16 %v601, %v594
    %v749 = vpack.c.b16 %v602, %v595
    %v750 = vpack.c.b16 %v610, %v603
    %v751 = vpack.c.b16 %v611, %v604
    %v752 = vpack.c.b16 %v612, %v605
    %v753 = vpack.c.b16 %v613, %v606
    %v754 = vpack.c.b16 %v614, %v607
    %v755 = vpack.c.b16 %v615, %v608
    %v756 = vpack.c.b16 %v616, %v609
    %v757 = vpack.c.b16 %v624, %v617
    %v758 = vpack.c.b16 %v625, %v618
    %v759 = vpack.c.b16 %v626, %v619
    %v760 = vpack.c.b16 %v627, %v620
    %v761 = vpack.c.b16 %v628, %v621
    %v762 = vpack.c.b16 %v629, %v622
    %v763 = vpack.c.b16 %v630, %v623
    %v764 = vpack.c.b16 %v638, %v631
    %v765 = vpack.c.b16 %v639, %v632
    %v766 = vpack.c.b16 %v640, %v633
    %v767 = vpack.c.b16 %v641, %v634
    %v768 = vpack.c.b16 %v642, %v635
    %v769 = vpack.c.b16 %v643, %v636
    %v770 = vpack.c.b16 %v644, %v637
    %v771 = vpack.c.b16 %v652, %v645
    %v772 = vpack.c.b16 %v653, %v646
    %v773 = vpack.c.b16 %v654, %v647
    %v774 = vpack.c.b16 %v655, %v648
    %v775 = vpack.c.b16 %v656, %v649
    %v776 = vpack.c.b16 %v657, %v650
    %v777 = vpack.c.b16 %v658, %v651
    %v778 = vpack.c.b16 %v666, %v659
    %v779 = vpack.c.b16 %v667, %v660
    %v780 = vpack.c.b16 %v668, %v661
    %v781 = vpack.c.b16 %v669, %v662
    %v782 = vpack.c.b16 %v670, %v663
    %v783 = vpack.c.b16 %v671, %v664
    %v784 = vpack.c.b16 %v672, %v665
    %897 = vmatprep.subr.bf16.mxu0 %v674
    %898 = vmatpush1.bf16.msra.mxu0 %v673
    %899 = vmatprep.subr.bf16.mxu0 %v681
    %900 = vmatpush1.bf16.msra.mxu0 %v680
    %901 = vmatprep.subr.bf16.mxu0 %v688
    %902 = vmatpush1.bf16.msra.mxu0 %v687
    %903 = vmatprep.subr.bf16.mxu0 %v695
    %904 = vmatpush1.bf16.msra.mxu0 %v694
    %905 = vmatprep.subr.bf16.mxu0 %v702
    %906 = vmatpush1.bf16.msra.mxu0 %v701
    %907 = vmatprep.subr.bf16.mxu0 %v709
    %908 = vmatpush1.bf16.msra.mxu0 %v708
    %909 = vmatprep.subr.bf16.mxu0 %v716
    %910 = vmatpush1.bf16.msra.mxu0 %v715
    %911 = vmatprep.subr.bf16.mxu0 %v723
    %912 = vmatpush1.bf16.msra.mxu0 %v722
    %913 = vmatprep.subr.bf16.mxu0 %v730
    %914 = vmatpush1.bf16.msra.mxu0 %v729
    %915 = vmatprep.subr.bf16.mxu0 %v737
    %916 = vmatpush1.bf16.msra.mxu0 %v736
    %917 = vmatprep.subr.bf16.mxu0 %v744
    %918 = vmatpush1.bf16.msra.mxu0 %v743
    %919 = vmatprep.subr.bf16.mxu0 %v751
    %920 = vmatpush1.bf16.msra.mxu0 %v750
    %921 = vmatprep.subr.bf16.mxu0 %v758
    %922 = vmatpush1.bf16.msra.mxu0 %v757
    %923 = vmatprep.subr.bf16.mxu0 %v765
    %924 = vmatpush1.bf16.msra.mxu0 %v764
    %925 = vmatprep.subr.bf16.mxu0 %v772
    %926 = vmatpush1.bf16.msra.mxu0 %v771
    %927 = vmatprep.subr.bf16.mxu0 %v779
    %928 = vmatpush1.bf16.msra.mxu0 %v778
    %929 = vmatprep.mubr.bf16.mxu0 %v155
    %930 = vmatmul.mubr.bf16.gmra.mrb[0].mxu0 %v154
    %v931 = vpop.f32.mrb[0].mxu0
    %v932 = vadd.f32 %v289, %v931
    %v933 = vpop.f32.mrb[0].mxu0
    %v934 = vadd.f32 %v293, %v933
    %v935 = vpop.f32.mrb[0].mxu0
    %v936 = vpop.f32.mrb[0].mxu0
    %937 = vdwg.mxu0
    %938 = vmatprep.subr.bf16.mxu0 %v676
    %939 = vmatpush1.bf16.msra.mxu0 %v675
    %940 = vmatprep.subr.bf16.mxu0 %v683
    %941 = vmatpush1.bf16.msra.mxu0 %v682
    %942 = vmatprep.subr.bf16.mxu0 %v690
    %943 = vmatpush1.bf16.msra.mxu0 %v689
    %944 = vmatprep.subr.bf16.mxu0 %v697
    %945 = vmatpush1.bf16.msra.mxu0 %v696
    %946 = vmatprep.subr.bf16.mxu0 %v704
    %947 = vmatpush1.bf16.msra.mxu0 %v703
    %948 = vmatprep.subr.bf16.mxu0 %v711
    %949 = vmatpush1.bf16.msra.mxu0 %v710
    %950 = vmatprep.subr.bf16.mxu0 %v718
    %951 = vmatpush1.bf16.msra.mxu0 %v717
    %952 = vmatprep.subr.bf16.mxu0 %v725
    %953 = vmatpush1.bf16.msra.mxu0 %v724
    %954 = vmatprep.subr.bf16.mxu0 %v732
    %955 = vmatpush1.bf16.msra.mxu0 %v731
    %956 = vmatprep.subr.bf16.mxu0 %v739
    %957 = vmatpush1.bf16.msra.mxu0 %v738
    %958 = vmatprep.subr.bf16.mxu0 %v746
    %959 = vmatpush1.bf16.msra.mxu0 %v745
    %960 = vmatprep.subr.bf16.mxu0 %v753
    %961 = vmatpush1.bf16.msra.mxu0 %v752
    %962 = vmatprep.subr.bf16.mxu0 %v760
    %963 = vmatpush1.bf16.msra.mxu0 %v759
    %964 = vmatprep.subr.bf16.mxu0 %v767
    %965 = vmatpush1.bf16.msra.mxu0 %v766
    %966 = vmatprep.subr.bf16.mxu0 %v774
    %967 = vmatpush1.bf16.msra.mxu0 %v773
    %968 = vmatprep.subr.bf16.mxu0 %v781
    %969 = vmatpush1.bf16.msra.mxu0 %v780
    %970 = vmatprep.mubr.bf16.mxu0 %v155
    %971 = vmatmul.mubr.bf16.gmra.mrb[0].mxu0 %v154
    %v972 = vpop.f32.mrb[0].mxu0
    %v973 = vadd.f32 %v297, %v972
    %v974 = vpop.f32.mrb[0].mxu0
    %v975 = vadd.f32 %v301, %v974
    %v976 = vpop.f32.mrb[0].mxu0
    %v977 = vpop.f32.mrb[0].mxu0
    %978 = vdwg.mxu0
    %979 = vmatprep.subr.bf16.mxu0 %v678
    %980 = vmatpush1.bf16.msra.mxu0 %v677
    %981 = vmatprep.subr.bf16.mxu0 %v685
    %982 = vmatpush1.bf16.msra.mxu0 %v684
    %983 = vmatprep.subr.bf16.mxu0 %v692
    %984 = vmatpush1.bf16.msra.mxu0 %v691
    %985 = vmatprep.subr.bf16.mxu0 %v699
    %986 = vmatpush1.bf16.msra.mxu0 %v698
    %987 = vmatprep.subr.bf16.mxu0 %v706
    %988 = vmatpush1.bf16.msra.mxu0 %v705
    %989 = vmatprep.subr.bf16.mxu0 %v713
    %990 = vmatpush1.bf16.msra.mxu0 %v712
    %991 = vmatprep.subr.bf16.mxu0 %v720
    %992 = vmatpush1.bf16.msra.mxu0 %v719
    %993 = vmatprep.subr.bf16.mxu0 %v727
    %994 = vmatpush1.bf16.msra.mxu0 %v726
    %995 = vmatprep.subr.bf16.mxu0 %v734
    %996 = vmatpush1.bf16.msra.mxu0 %v733
    %997 = vmatprep.subr.bf16.mxu0 %v741
    %998 = vmatpush1.bf16.msra.mxu0 %v740
    %999 = vmatprep.subr.bf16.mxu0 %v748
    %1000 = vmatpush1.bf16.msra.mxu0 %v747
    %1001 = vmatprep.subr.bf16.mxu0 %v755
    %1002 = vmatpush1.bf16.msra.mxu0 %v754
    %1003 = vmatprep.subr.bf16.mxu0 %v762
    %1004 = vmatpush1.bf16.msra.mxu0 %v761
    %1005 = vmatprep.subr.bf16.mxu0 %v769
    %1006 = vmatpush1.bf16.msra.mxu0 %v768
    %1007 = vmatprep.subr.bf16.mxu0 %v776
    %1008 = vmatpush1.bf16.msra.mxu0 %v775
    %1009 = vmatprep.subr.bf16.mxu0 %v783
    %1010 = vmatpush1.bf16.msra.mxu0 %v782
    %1011 = vmatprep.mubr.bf16.mxu0 %v155
    %1012 = vmatmul.mubr.bf16.gmra.mrb[0].mxu0 %v154
    %v1013 = vpop.f32.mrb[0].mxu0
    %v1014 = vadd.f32 %v305, %v1013
    %v1015 = vpop.f32.mrb[0].mxu0
    %v1016 = vadd.f32 %v309, %v1015
    %v1017 = vpop.f32.mrb[0].mxu0
    %v1018 = vpop.f32.mrb[0].mxu0
    %1019 = vdwg.mxu0
    %1020 = vmatprep.subr.bf16.mxu0 0
    %1021 = vmatpush1.bf16.msra.mxu0 %v679
    %1022 = vmatprep.subr.bf16.mxu0 0
    %1023 = vmatpush1.bf16.msra.mxu0 %v686
    %1024 = vmatprep.subr.bf16.mxu0 0
    %1025 = vmatpush1.bf16.msra.mxu0 %v693
    %1026 = vmatprep.subr.bf16.mxu0 0
    %1027 = vmatpush1.bf16.msra.mxu0 %v700
    %1028 = vmatprep.subr.bf16.mxu0 0
    %1029 = vmatpush1.bf16.msra.mxu0 %v707
    %1030 = vmatprep.subr.bf16.mxu0 0
    %1031 = vmatpush1.bf16.msra.mxu0 %v714
    %1032 = vmatprep.subr.bf16.mxu0 0
    %1033 = vmatpush1.bf16.msra.mxu0 %v721
    %1034 = vmatprep.subr.bf16.mxu0 0
    %1035 = vmatpush1.bf16.msra.mxu0 %v728
    %1036 = vmatprep.subr.bf16.mxu0 0
    %1037 = vmatpush1.bf16.msra.mxu0 %v735
    %1038 = vmatprep.subr.bf16.mxu0 0
    %1039 = vmatpush1.bf16.msra.mxu0 %v742
    %1040 = vmatprep.subr.bf16.mxu0 0
    %1041 = vmatpush1.bf16.msra.mxu0 %v749
    %1042 = vmatprep.subr.bf16.mxu0 0
    %1043 = vmatpush1.bf16.msra.mxu0 %v756
    %1044 = vmatprep.subr.bf16.mxu0 0
    %1045 = vmatpush1.bf16.msra.mxu0 %v763
    %1046 = vmatprep.subr.bf16.mxu0 0
    %1047 = vmatpush1.bf16.msra.mxu0 %v770
    %1048 = vmatprep.subr.bf16.mxu0 0
    %1049 = vmatpush1.bf16.msra.mxu0 %v777
    %1050 = vmatprep.subr.bf16.mxu0 0
    %1051 = vmatpush1.bf16.msra.mxu0 %v784
    %1052 = vmatprep.mubr.bf16.mxu0 %v155
    %1053 = vmatmul.mubr.bf16.gmra.mrb[0].mxu0 %v154
    %v1054 = vpop.f32.mrb[0].mxu0
    %v1055 = vadd.f32 %v313, %v1054
    %v1056 = vpop.f32.mrb[0].mxu0
    %v1057 = vpop.f32.mrb[0].mxu0
    %v1058 = vpop.f32.mrb[0].mxu0
    %1059 = vdwg.mxu0
    %v1060 = vtanh.pop %v932
    %v1061 = vtanh.pop %v934
    %v1062 = vtanh.pop %v973
    %v1063 = vtanh.pop %v975
    %v1064 = vtanh.pop %v1014
    %v1065 = vtanh.pop %v1016
    %v1066 = vtanh.pop %v1055
    %1067 = vst [vmem:[#allocation8] sm:$0xff] %v1060
    %1068 = vst [vmem:[#allocation8 + $0x8] sm:$0xff] %v1061
    %1069 = vst [vmem:[#allocation8 + $0x10] sm:$0xff] %v1062
    %1070 = vst [vmem:[#allocation8 + $0x18] sm:$0xff] %v1063
    %1071 = vst [vmem:[#allocation8 + $0x20] sm:$0xff] %v1064
    %1072 = vst [vmem:[#allocation8 + $0x28] sm:$0xff] %v1065
    %1073 = vst [vmem:[#allocation8 + $0x30] sm:$0xff] %v1066
    // Predicated region
    $region30: #{tpu_custom_call.1} parent=1 // pred_check
      _
    $region31: #{tpu_custom_call.1} parent=1 // pred_check_branch
      %1075 = sbr.rel (0) target = $region33
    $region32: #{tpu_custom_call.1} parent=1 // pred_region
      %s1077 = ssub.s32 896, 896
      %1078 = vsyncadd [#allocation4], %s1077
      %s1080 = sshll.u32 [#allocation8], 4
      %s1081 = int_to_ptr.vmem [resolvable:$true] %s1080
      %1083 = dma.vmem_to_hbm [thread:$0]  %s1081, 896, %s4, [#allocation4]
    $region33: #{tpu_custom_call.1} parent=1 // pred_fallthru
      _
    // Predicated region
    $region34: #{tpu_custom_call.1} parent=1 // pred_check
      _
    $region35: #{tpu_custom_call.1} parent=1 // pred_check_branch
      %1085 = sbr.rel (0) target = $region37
    $region36: #{tpu_custom_call.1} parent=1 // pred_region
      %1086 = dma.done [#allocation4], 896
    $region37: #{tpu_custom_call.1} parent=1 // pred_fallthru
      _
    %1087 = vsyncpa [#allocation3], 1
    %1088 = vsyncpa [#allocation6], 1
    %1089 = vsyncpa [#allocation4], 1

</llo_original>
